<compile_context>
chip_gen: v7x
topology: tpu7x:2x2x1
jax: 0.10.0
libtpu: 0.0.40
codegen_flags: <defaults>
</compile_context>

<pallas_src>
import jax
import jax.numpy as jnp
from jax.experimental import pallas as pl
from jax.experimental.pallas import tpu as pltpu

IN_DIM = 8
HIDDEN = 128
N_ACT = 4
LANES = 128       # lane-dense output width (one full f32 vreg lane row)
NEG_BIG = -1e30   # finite "-inf" for the masked softmax


def _round_up(n, m):
    return ((n + m - 1) // m) * m


def actor_critic_kernel(x_ref, w1_ref, b1_ref, wh_ref, bh_ref, out_ref):
    """One batch tile.

    x_ref  : (TB, 8)     states (f32 or bf16)
    w1_ref : (8, 128)    affine weight (in, out)
    b1_ref : (1, 128)    affine bias (f32)
    wh_ref : (128, 128)  fused head weight: cols 0:4 action, 4:8 action (dup), 8 value, rest 0
    bh_ref : (1, 128)    fused head bias, same layout (f32)
    out_ref: (TB, 128)   lane-dense slab: cols 0:4 probs | 4:8 logp | 8 value | 9: zeros
    """
    # Hidden layer on the MXU, f32 accumulation, ReLU on the VPU.
    h = jnp.dot(x_ref[...], w1_ref[...], preferred_element_type=jnp.float32)
    h = jnp.maximum(h + b1_ref[...], 0.0)

    # Single fused 128-wide head matmul (replaces two sub-lane-width matmuls).
    heads = jnp.dot(h.astype(wh_ref.dtype), wh_ref[...],
                    preferred_element_type=jnp.float32) + bh_ref[...]

    lane = jax.lax.broadcasted_iota(jnp.int32, heads.shape, dimension=1)
    act_lane = lane < N_ACT

    # Masked softmax over the 4 action lanes, computed at full 128-lane width.
    masked = jnp.where(act_lane, heads, jnp.float32(NEG_BIG))
    m = jnp.max(masked, axis=-1, keepdims=True)          # (TB, 1)
    e = jnp.exp(masked - m)                              # 0 outside action lanes
    denom = jnp.sum(e, axis=-1, keepdims=True)           # (TB, 1)
    inv = pl.reciprocal(denom, approx=False)             # divide -> EUP slot
    log_denom = jnp.log(denom)

    probs_full = e * inv                                 # valid in lanes 0:4
    logp_full = (heads - m) - log_denom                  # valid in lanes 4:8 (dup logits)

    # One full-width, unmasked store of the packed result slab.
    out_ref[...] = jnp.where(
        act_lane, probs_full,
        jnp.where(lane < 2 * N_ACT, logp_full,
                  jnp.where(lane == 2 * N_ACT, heads, 0.0)))


def actor_critic_forward(x, w1, b1, wa, ba, wv, bv, *,
                         tile_b=512, compute_dtype=jnp.float32):
    """x: (B, 8).  Returns (action_probs (B,4), log_probs (B,4), value (B,1)), all f32."""
    B = x.shape[0]

    # Fuse action / value heads into one lane-aligned (128, 128) weight + bias.
    wh = jnp.zeros((HIDDEN, LANES), jnp.float32)
    wh = wh.at[:, 0:N_ACT].set(wa)
    wh = wh.at[:, N_ACT:2 * N_ACT].set(wa)                # duplicate logits for logp lanes
    wh = wh.at[:, 2 * N_ACT:2 * N_ACT + 1].set(wv)
    bh = jnp.zeros((1, LANES), jnp.float32)
    bh = bh.at[:, 0:N_ACT].set(ba)
    bh = bh.at[:, N_ACT:2 * N_ACT].set(ba)
    bh = bh.at[:, 2 * N_ACT:2 * N_ACT + 1].set(bv)

    # Batch tiling: tile is a multiple of 8 sublanes; pad B to whole tiles.
    tb = _round_up(min(tile_b, _round_up(B, 8)), 8)
    b_pad = _round_up(B, tb)
    if b_pad != B:
        x = jnp.pad(x, ((0, b_pad - B), (0, 0)))

    x_c = x.astype(compute_dtype)
    w1_c = w1.astype(compute_dtype)
    wh_c = wh.astype(compute_dtype)

    out = pl.pallas_call(
        actor_critic_kernel,
        out_shape=jax.ShapeDtypeStruct((b_pad, LANES), jnp.float32),
        grid_spec=pltpu.PrefetchScalarGridSpec(
            num_scalar_prefetch=0,
            grid=(pl.cdiv(b_pad, tb),),
            in_specs=[
                pl.BlockSpec((tb, IN_DIM), lambda i: (i, 0)),       # states, tiled over batch
                pl.BlockSpec((IN_DIM, HIDDEN), lambda i: (0, 0)),   # weights stay resident
                pl.BlockSpec((1, HIDDEN), lambda i: (0, 0)),
                pl.BlockSpec((HIDDEN, LANES), lambda i: (0, 0)),
                pl.BlockSpec((1, LANES), lambda i: (0, 0)),
            ],
            out_specs=pl.BlockSpec((tb, LANES), lambda i: (i, 0)),
        ),
        compiler_params=pltpu.CompilerParams(
            dimension_semantics=("parallel",)),   # batch axis shards across TCs on v7x
    )(x_c, w1_c, b1, wh_c, bh)

    probs = out[:B, 0:N_ACT]
    logp = out[:B, N_ACT:2 * N_ACT]
    value = out[:B, 2 * N_ACT:2 * N_ACT + 1]
    return probs, logp, value


def reference_forward(x, w1, b1, wa, ba, wv, bv):
    h = jnp.maximum(x @ w1 + b1, 0.0)
    v = h @ wv + bv
    logits = h @ wa + ba
    return jax.nn.softmax(logits, axis=-1), jax.nn.log_softmax(logits, axis=-1), v


def init_params(key):
    """Deterministic synthetic parameters matching the PyTorch layer shapes (as (in, out))."""
    k1, k2, k3, k4, k5, k6 = jax.random.split(key, 6)
    w1 = jax.random.normal(k1, (IN_DIM, HIDDEN), jnp.float32) * (1.0 / jnp.sqrt(IN_DIM))
    b1 = jax.random.normal(k2, (1, HIDDEN), jnp.float32) * 0.01
    wa = jax.random.normal(k3, (HIDDEN, N_ACT), jnp.float32) * (1.0 / jnp.sqrt(HIDDEN))
    ba = jax.random.normal(k4, (1, N_ACT), jnp.float32) * 0.01
    wv = jax.random.normal(k5, (HIDDEN, 1), jnp.float32) * (1.0 / jnp.sqrt(HIDDEN))
    bv = jax.random.normal(k6, (1, 1), jnp.float32) * 0.01
    return w1, b1, wa, ba, wv, bv


if __name__ == "__main__":
    key = jax.random.PRNGKey(0)
    pkey, xkey, x2key, skey = jax.random.split(key, 4)
    params = init_params(pkey)

    # --- small batch (single grid step), f32 path ---
    x = jax.random.normal(xkey, (8, IN_DIM), jnp.float32)
    probs, logp, value = jax.block_until_ready(actor_critic_forward(x, *params))
    p_ref, lp_ref, v_ref = reference_forward(x, *params)
    assert jnp.allclose(probs, p_ref, atol=1e-4, rtol=1e-4)
    assert jnp.allclose(logp, lp_ref, atol=1e-4, rtol=1e-4)
    assert jnp.allclose(value, v_ref, atol=1e-4, rtol=1e-4)
    assert jnp.allclose(jnp.sum(probs, axis=-1), 1.0, atol=1e-5)

    # Categorical sampling + log_prob of the sampled action (plain-JAX glue,
    # mirrors torch.distributions.Categorical usage in the module).
    actions = jax.random.categorical(skey, logp, axis=-1)
    chosen_logprob = jnp.take_along_axis(logp, actions[:, None], axis=-1)[:, 0]
    jax.block_until_ready((actions, chosen_logprob))

    # --- ragged batch exercising the grid (3 tiles of 128, padded from B=300) ---
    x2 = jax.random.normal(x2key, (300, IN_DIM), jnp.float32)
    p2, lp2, v2 = jax.block_until_ready(
        actor_critic_forward(x2, *params, tile_b=128))
    p2r, lp2r, v2r = reference_forward(x2, *params)
    assert jnp.allclose(p2, p2r, atol=1e-4, rtol=1e-4)
    assert jnp.allclose(lp2, lp2r, atol=1e-4, rtol=1e-4)
    assert jnp.allclose(v2, v2r, atol=1e-4, rtol=1e-4)

    # --- bf16 input/weight path (bandwidth-bound large-batch mode on v6e/v7x) ---
    p3, lp3, v3 = jax.block_until_ready(
        actor_critic_forward(x2, *params, tile_b=128, compute_dtype=jnp.bfloat16))
    assert jnp.allclose(p3, p2r, atol=5e-2, rtol=5e-2)
    assert jnp.allclose(v3, v2r, atol=5e-2, rtol=5e-2)
    assert jnp.allclose(jnp.sum(p3, axis=-1), 1.0, atol=1e-3)

    # TODO(synk): calc_loss / memory-buffer bookkeeping is host-side training logic,
    # not part of the forward hot path, so it is not implemented as a kernel.
    print("KERNEL_OK")
</pallas_src>

<mosaic_0001>
module attributes {stable_mosaic.version = 11 : i64} {
  func.func @actor_critic_kernel(%arg0: i32, %arg1: memref<8x8xf32, #tpu.memory_space<vmem>>, %arg2: memref<8x128xf32, #tpu.memory_space<vmem>>, %arg3: memref<1x128xf32, #tpu.memory_space<vmem>>, %arg4: memref<128x128xf32, #tpu.memory_space<vmem>>, %arg5: memref<1x128xf32, #tpu.memory_space<vmem>>, %arg6: memref<8x128xf32, #tpu.memory_space<vmem>>) attributes {dimension_semantics = [#tpu.dimension_semantics<parallel>], iteration_bounds = array<i64: 1>, scalar_prefetch = 0 : i64, scratch_operands = 0 : i64, tpu.core_type = #tpu.core_type<tc>, window_params = [{transform_indices = @transform_0, window_bounds = array<i64: 8, 8>}, {pipeline_mode = #tpu.pipeline_mode<synchronous>, transform_indices = @transform_1, window_bounds = array<i64: 8, 128>}, {pipeline_mode = #tpu.pipeline_mode<synchronous>, transform_indices = @transform_2, window_bounds = array<i64: 1, 128>}, {pipeline_mode = #tpu.pipeline_mode<synchronous>, transform_indices = @transform_3, window_bounds = array<i64: 128, 128>}, {pipeline_mode = #tpu.pipeline_mode<synchronous>, transform_indices = @transform_4, window_bounds = array<i64: 1, 128>}, {transform_indices = @transform_5, window_bounds = array<i64: 8, 128>}]} {
    %c0 = arith.constant 0 : index
    %c0_0 = arith.constant 0 : index
    %0 = vector.load %arg1[%c0, %c0_0] : memref<8x8xf32, #tpu.memory_space<vmem>>, vector<8x8xf32>
    %c0_1 = arith.constant 0 : index
    %c0_2 = arith.constant 0 : index
    %1 = vector.load %arg2[%c0_1, %c0_2] : memref<8x128xf32, #tpu.memory_space<vmem>>, vector<8x128xf32>
    %cst = arith.constant dense<0.000000e+00> : vector<8x128xf32>
    %2 = tpu.matmul %0, %1, %cst {dimension_numbers = #tpu.dot_dimension_numbers<[1], [0], [0], [1], [0, 0, 1, 1], [], []>} : vector<8x8xf32>, vector<8x128xf32>, vector<8x128xf32> -> vector<8x128xf32>
    %c0_3 = arith.constant 0 : index
    %c0_4 = arith.constant 0 : index
    %3 = vector.load %arg3[%c0_3, %c0_4] : memref<1x128xf32, #tpu.memory_space<vmem>>, vector<1x128xf32>
    %4 = vector.broadcast %3 : vector<1x128xf32> to vector<8x128xf32>
    %5 = arith.addf %2, %4 : vector<8x128xf32>
    %cst_5 = arith.constant 0.000000e+00 : f32
    %6 = vector.broadcast %cst_5 : f32 to vector<8x128xf32>
    %7 = arith.maximumf %5, %6 : vector<8x128xf32>
    %c0_6 = arith.constant 0 : index
    %c0_7 = arith.constant 0 : index
    %8 = vector.load %arg4[%c0_6, %c0_7] : memref<128x128xf32, #tpu.memory_space<vmem>>, vector<128x128xf32>
    %cst_8 = arith.constant dense<0.000000e+00> : vector<8x128xf32>
    %9 = tpu.matmul %7, %8, %cst_8 {dimension_numbers = #tpu.dot_dimension_numbers<[1], [0], [0], [1], [0, 0, 1, 1], [], []>} : vector<8x128xf32>, vector<128x128xf32>, vector<8x128xf32> -> vector<8x128xf32>
    %c0_9 = arith.constant 0 : index
    %c0_10 = arith.constant 0 : index
    %10 = vector.load %arg5[%c0_9, %c0_10] : memref<1x128xf32, #tpu.memory_space<vmem>>, vector<1x128xf32>
    %11 = vector.broadcast %10 : vector<1x128xf32> to vector<8x128xf32>
    %12 = arith.addf %9, %11 : vector<8x128xf32>
    %13 = tpu.iota {dimensions = array<i32: 1>} : vector<8x128xi32>
    %c4_i32 = arith.constant 4 : i32
    %14 = vector.broadcast %c4_i32 : i32 to vector<8x128xi32>
    %15 = arith.cmpi slt, %13, %14 : vector<8x128xi32>
    %cst_11 = arith.constant -1.000000e+30 : f32
    %16 = vector.broadcast %cst_11 : f32 to vector<8x128xf32>
    %17 = arith.select %15, %12, %16 : vector<8x128xi1>, vector<8x128xf32>
    %cst_12 = arith.constant dense<0xFF800000> : vector<8xf32>
    %18 = vector.multi_reduction <maximumf>, %17, %cst_12 [1] : vector<8x128xf32> to vector<8xf32>
    %19 = vector.shape_cast %18 : vector<8xf32> to vector<8x1xf32>
    %20 = vector.broadcast %19 : vector<8x1xf32> to vector<8x128xf32>
    %21 = arith.subf %17, %20 : vector<8x128xf32>
    %22 = math.exp %21 : vector<8x128xf32>
    %cst_13 = arith.constant dense<0.000000e+00> : vector<8xf32>
    %23 = vector.multi_reduction <add>, %22, %cst_13 [1] : vector<8x128xf32> to vector<8xf32>
    %24 = vector.shape_cast %23 : vector<8xf32> to vector<8x1xf32>
    %25 = tpu.reciprocal %24 : vector<8x1xf32> -> vector<8x1xf32>
    %26 = math.log %24 : vector<8x1xf32>
    %27 = vector.broadcast %25 : vector<8x1xf32> to vector<8x128xf32>
    %28 = arith.mulf %22, %27 : vector<8x128xf32>
    %29 = vector.broadcast %19 : vector<8x1xf32> to vector<8x128xf32>
    %30 = arith.subf %12, %29 : vector<8x128xf32>
    %31 = vector.broadcast %26 : vector<8x1xf32> to vector<8x128xf32>
    %32 = arith.subf %30, %31 : vector<8x128xf32>
    %c8_i32 = arith.constant 8 : i32
    %33 = vector.broadcast %c8_i32 : i32 to vector<8x128xi32>
    %34 = arith.cmpi slt, %13, %33 : vector<8x128xi32>
    %c8_i32_14 = arith.constant 8 : i32
    %35 = vector.broadcast %c8_i32_14 : i32 to vector<8x128xi32>
    %36 = arith.cmpi eq, %13, %35 : vector<8x128xi32>
    %cst_15 = arith.constant 0.000000e+00 : f32
    %37 = vector.broadcast %cst_15 : f32 to vector<8x128xf32>
    %38 = arith.select %36, %12, %37 : vector<8x128xi1>, vector<8x128xf32>
    %39 = arith.select %34, %32, %38 : vector<8x128xi1>, vector<8x128xf32>
    %40 = arith.select %15, %28, %39 : vector<8x128xi1>, vector<8x128xf32>
    %c0_16 = arith.constant 0 : index
    %c0_17 = arith.constant 0 : index
    %41 = vector.load %arg6[%c0_16, %c0_17] : memref<8x128xf32, #tpu.memory_space<vmem>>, vector<8x128xf32>
    tpu.vector_store %arg6[%c0_16, %c0_17], %40 {strides = array<i32>} : memref<8x128xf32, #tpu.memory_space<vmem>>, vector<8x128xf32>,
    return
  }
  func.func @transform_0(%arg0: i32) -> (i32, i32) {
    %c0_i32 = arith.constant 0 : i32
    %c0_i32_0 = arith.constant 0 : i32
    return %arg0, %c0_i32 : i32, i32
  }
  func.func @transform_1(%arg0: i32) -> (i32, i32) {
    %c0_i32 = arith.constant 0 : i32
    %c0_i32_0 = arith.constant 0 : i32
    %c0_i32_1 = arith.constant 0 : i32
    return %c0_i32, %c0_i32_0 : i32, i32
  }
  func.func @transform_2(%arg0: i32) -> (i32, i32) {
    %c0_i32 = arith.constant 0 : i32
    %c0_i32_0 = arith.constant 0 : i32
    %c0_i32_1 = arith.constant 0 : i32
    return %c0_i32, %c0_i32_0 : i32, i32
  }
  func.func @transform_3(%arg0: i32) -> (i32, i32) {
    %c0_i32 = arith.constant 0 : i32
    %c0_i32_0 = arith.constant 0 : i32
    %c0_i32_1 = arith.constant 0 : i32
    return %c0_i32, %c0_i32_0 : i32, i32
  }
  func.func @transform_4(%arg0: i32) -> (i32, i32) {
    %c0_i32 = arith.constant 0 : i32
    %c0_i32_0 = arith.constant 0 : i32
    %c0_i32_1 = arith.constant 0 : i32
    return %c0_i32, %c0_i32_0 : i32, i32
  }
  func.func @transform_5(%arg0: i32) -> (i32, i32) {
    %c0_i32 = arith.constant 0 : i32
    %c0_i32_0 = arith.constant 0 : i32
    return %arg0, %c0_i32 : i32, i32
  }
}

</mosaic_0001>

<llo_original>
// kernel: tpu_custom_call.1
$region0: #{tpu_custom_call.1}
  #allocation0 [shape = 'u32[]', space=smem, size = 0x4, offset = 0x4, fixed_abs, tag = 'smem constant byte address 0x4 - core index']
  #allocation1 [shape = 'u32[144,128]{1,0:T(1,128)}', space=vmem, size = 0x12000, scoped, tag = 'internal scratch']
  %s0 = inlined_call_operand.hbm [shape: f32[8,8], index: 0, kind: input, shape index: {}]
  %s1 = inlined_call_operand.hbm [shape: f32[8,128], index: 1, kind: input, shape index: {}]
  %s2 = inlined_call_operand.vmem [shape: f32[1,128], index: 2, kind: input, shape index: {}]
  %s3 = inlined_call_operand.hbm [shape: f32[128,128], index: 3, kind: input, shape index: {}]
  %s4 = inlined_call_operand.vmem [shape: f32[1,128], index: 4, kind: input, shape index: {}]
  %s5 = inlined_call_operand.hbm [shape: f32[8,128], index: 5, kind: output, shape index: {}]
  %s6 = sld [smem:[#allocation0]]
  $region42: #{tpu_custom_call.1} parent=0
    _
  %s8 = ssub.s32 1, %s6
  %s9 = scalar_select 0, %s8, %s6
  $region1: #{tpu_custom_call.1} parent=0
    #allocation2 [shape = 'u8[4096]{0}', space=vmem, size = 0x1000, scoped, tag = 'input window, operand 0, single buffered']
    #allocation3 [shape = 's32[1]{0}', space=sflag, size = 0x4, scoped, tag = 'scoped memory for tpu_custom_call.1']
    #allocation4 [shape = 's32[1]{0}', space=sflag, size = 0x4, scoped, tag = 'scoped memory for tpu_custom_call.1']
    #allocation5 [shape = 'u8[4096]{0}', space=vmem, size = 0x1000, scoped, tag = 'input window, operand 1, single buffered']
    #allocation6 [shape = 's32[1]{0}', space=sflag, size = 0x4, scoped, tag = 'scoped memory for tpu_custom_call.1']
    #allocation7 [shape = 'u8[65536]{0}', space=vmem, size = 0x10000, scoped, tag = 'input window, operand 3, single buffered']
    #allocation8 [shape = 'u8[4096]{0}', space=vmem, size = 0x1000, scoped, tag = 'output window, operand 0, single buffered']
    %10 = vsyncpa [#allocation3], 0
    %11 = vsyncpa [#allocation6], 0
    %12 = vsyncpa [#allocation4], 0
    // Predicated region
    $region2: #{tpu_custom_call.1} parent=1 // pred_check
      _
    $region3: #{tpu_custom_call.1} parent=1 // pred_check_branch
      %14 = sbr.rel (0) target = $region5
    $region4: #{tpu_custom_call.1} parent=1 // pred_region
      %s16 = ssub.s32 128, 128
      %17 = vsyncadd [#allocation3], %s16
      %s19 = sshll.u32 [#allocation2], 4
      %s20 = int_to_ptr.vmem [resolvable:$true] %s19
      %22 = dma.hbm_to_vmem [thread:$0]  %s0, 128, %s20, [#allocation3]
    $region5: #{tpu_custom_call.1} parent=1 // pred_fallthru
      _
    // Predicated region
    $region6: #{tpu_custom_call.1} parent=1 // pred_check
      _
    $region7: #{tpu_custom_call.1} parent=1 // pred_check_branch
      %24 = sbr.rel (0) target = $region9
    $region8: #{tpu_custom_call.1} parent=1 // pred_region
      %s26 = ssub.s32 128, 128
      %27 = vsyncadd [#allocation6], %s26
      %s29 = sshll.u32 [#allocation5], 4
      %s30 = int_to_ptr.vmem [resolvable:$true] %s29
      %32 = dma.hbm_to_vmem [thread:$0]  %s1, 128, %s30, [#allocation6]
    $region9: #{tpu_custom_call.1} parent=1 // pred_fallthru
      _
    // Predicated region
    $region10: #{tpu_custom_call.1} parent=1 // pred_check
      _
    $region11: #{tpu_custom_call.1} parent=1 // pred_check_branch
      %34 = sbr.rel (0) target = $region13
    $region12: #{tpu_custom_call.1} parent=1 // pred_region
      _
    $region13: #{tpu_custom_call.1} parent=1 // pred_fallthru
      _
    // Predicated region
    $region14: #{tpu_custom_call.1} parent=1 // pred_check
      _
    $region15: #{tpu_custom_call.1} parent=1 // pred_check_branch
      %36 = sbr.rel (0) target = $region17
    $region16: #{tpu_custom_call.1} parent=1 // pred_region
      %s38 = ssub.s32 2048, 2048
      %39 = vsyncadd [#allocation6], %s38
      %s40 = sshll.u32 [#allocation7], 4
      %s41 = int_to_ptr.vmem [resolvable:$true] %s40
      %46 = dma.hbm_to_vmem [thread:$0]  %s3, 2048, %s41, [#allocation6], 128, 128, 8
    $region17: #{tpu_custom_call.1} parent=1 // pred_fallthru
      _
    // Predicated region
    $region18: #{tpu_custom_call.1} parent=1 // pred_check
      _
    $region19: #{tpu_custom_call.1} parent=1 // pred_check_branch
      %48 = sbr.rel (0) target = $region21
    $region20: #{tpu_custom_call.1} parent=1 // pred_region
      _
    $region21: #{tpu_custom_call.1} parent=1 // pred_fallthru
      _
    // Predicated region
    $region22: #{tpu_custom_call.1} parent=1 // pred_check
      _
    $region23: #{tpu_custom_call.1} parent=1 // pred_check_branch
      %50 = sbr.rel (0) target = $region25
    $region24: #{tpu_custom_call.1} parent=1 // pred_region
      %51 = dma.done [#allocation3], 128
    $region25: #{tpu_custom_call.1} parent=1 // pred_fallthru
      _
    // Predicated region
    $region26: #{tpu_custom_call.1} parent=1 // pred_check
      _
    $region27: #{tpu_custom_call.1} parent=1 // pred_check_branch
      %53 = sbr.rel (0) target = $region29
    $region28: #{tpu_custom_call.1} parent=1 // pred_region
      %54 = dma.done [#allocation6], 128
    $region29: #{tpu_custom_call.1} parent=1 // pred_fallthru
      _
    // Predicated region
    $region30: #{tpu_custom_call.1} parent=1 // pred_check
      _
    $region31: #{tpu_custom_call.1} parent=1 // pred_check_branch
      %56 = sbr.rel (0) target = $region33
    $region32: #{tpu_custom_call.1} parent=1 // pred_region
      %57 = dma.done [#allocation6], 2048
    $region33: #{tpu_custom_call.1} parent=1 // pred_fallthru
      _
    %v58 = vld [vmem:[#allocation2] sm:$0xff]
    %v59 = vld [vmem:[#allocation5] sm:$0xff]
    %v60 = vld [vmem:[%s2] sm:$0x1]
    %v62 = vlaneseq
    %v63 = vshrl.u32 %v62, 7
    %v64 = vsub.s32 0, %v63
    %v65 = vrot.slane %v60, %v64
    %vm67 = vcmask 64512
    %v69 = vsel %vm67, %v58, 0
    %71 = vmatprep.subr.mxu0 0.0
    %72 = vmatpush1.msra.mxu0 %v59
    %73 = vmatprep.subr.mxu0 0.0
    %74 = vmatpush1.msra.mxu0 0.0
    %75 = vmatprep.subr.mxu0 0.0
    %76 = vmatpush1.msra.mxu0 0.0
    %77 = vmatprep.subr.mxu0 0.0
    %78 = vmatpush1.msra.mxu0 0.0
    %79 = vmatprep.subr.mxu0 0.0
    %80 = vmatpush1.msra.mxu0 0.0
    %81 = vmatprep.subr.mxu0 0.0
    %82 = vmatpush1.msra.mxu0 0.0
    %83 = vmatprep.subr.mxu0 0.0
    %84 = vmatpush1.msra.mxu0 0.0
    %85 = vmatprep.subr.mxu0 0.0
    %86 = vmatpush1.msra.mxu0 0.0
    %87 = vmatprep.subr.mxu0 0.0
    %88 = vmatpush1.msra.mxu0 0.0
    %89 = vmatprep.subr.mxu0 0.0
    %90 = vmatpush1.msra.mxu0 0.0
    %91 = vmatprep.subr.mxu0 0.0
    %92 = vmatpush1.msra.mxu0 0.0
    %93 = vmatprep.subr.mxu0 0.0
    %94 = vmatpush1.msra.mxu0 0.0
    %95 = vmatprep.subr.mxu0 0.0
    %96 = vmatpush1.msra.mxu0 0.0
    %97 = vmatprep.subr.mxu0 0.0
    %98 = vmatpush1.msra.mxu0 0.0
    %99 = vmatprep.subr.mxu0 0.0
    %100 = vmatpush1.msra.mxu0 0.0
    %101 = vmatprep.subr.mxu0 0.0
    %102 = vmatpush1.msra.mxu0 0.0
    %103 = vmatprep.subr.mxu0 0.0
    %104 = vmatpush1.msra.mxu0 0.0
    %105 = vmatprep.subr.mxu0 0.0
    %106 = vmatpush1.msra.mxu0 0.0
    %107 = vmatprep.subr.mxu0 0.0
    %108 = vmatpush1.msra.mxu0 0.0
    %109 = vmatprep.subr.mxu0 0.0
    %110 = vmatpush1.msra.mxu0 0.0
    %111 = vmatprep.subr.mxu0 0.0
    %112 = vmatpush1.msra.mxu0 0.0
    %113 = vmatprep.subr.mxu0 0.0
    %114 = vmatpush1.msra.mxu0 0.0
    %115 = vmatprep.subr.mxu0 0.0
    %116 = vmatpush1.msra.mxu0 0.0
    %117 = vmatprep.subr.mxu0 0.0
    %118 = vmatpush1.msra.mxu0 0.0
    %119 = vmatprep.subr.mxu0 0.0
    %120 = vmatpush1.msra.mxu0 0.0
    %121 = vmatprep.subr.mxu0 0.0
    %122 = vmatpush1.msra.mxu0 0.0
    %123 = vmatprep.subr.mxu0 0.0
    %124 = vmatpush1.msra.mxu0 0.0
    %125 = vmatprep.subr.mxu0 0.0
    %126 = vmatpush1.msra.mxu0 0.0
    %127 = vmatprep.subr.mxu0 0.0
    %128 = vmatpush1.msra.mxu0 0.0
    %129 = vmatprep.subr.mxu0 0.0
    %130 = vmatpush1.msra.mxu0 0.0
    %131 = vmatprep.subr.mxu0 0.0
    %132 = vmatpush1.msra.mxu0 0.0
    %133 = vmatprep.subr.mxu0 0.0
    %134 = vmatpush1.msra.mxu0 0.0
    %135 = vmatprep.mubr.f32.mxu0 0.0
    %136 = vmatmul.mubr.f32.gmra.mrb[0].mxu0 %v69
    %v137 = vpop.f32.mrb[0].mxu0
    %v138 = vadd.f32 %v65, %v137
    %v139 = vpop.f32.mrb[0].mxu0
    %140 = vdwg.mxu0
    %v141 = vmax.f32 %v138, 0.0
    %v142 = vld [vmem:[#allocation7] sm:$0xff]
    %v143 = vld [vmem:[#allocation7 + $0x8] sm:$0xff]
    %v144 = vld [vmem:[#allocation7 + $0x10] sm:$0xff]
    %v145 = vld [vmem:[#allocation7 + $0x18] sm:$0xff]
    %v146 = vld [vmem:[#allocation7 + $0x20] sm:$0xff]
    %v147 = vld [vmem:[#allocation7 + $0x28] sm:$0xff]
    %v148 = vld [vmem:[#allocation7 + $0x30] sm:$0xff]
    %v149 = vld [vmem:[#allocation7 + $0x38] sm:$0xff]
    %v150 = vld [vmem:[#allocation7 + $0x40] sm:$0xff]
    %v151 = vld [vmem:[#allocation7 + $0x48] sm:$0xff]
    %v152 = vld [vmem:[#allocation7 + $0x50] sm:$0xff]
    %v153 = vld [vmem:[#allocation7 + $0x58] sm:$0xff]
    %v154 = vld [vmem:[#allocation7 + $0x60] sm:$0xff]
    %v155 = vld [vmem:[#allocation7 + $0x68] sm:$0xff]
    %v156 = vld [vmem:[#allocation7 + $0x70] sm:$0xff]
    %v157 = vld [vmem:[#allocation7 + $0x78] sm:$0xff]
    %v158 = vld [vmem:[%s4] sm:$0x1]
    %v160 = vlaneseq
    %v161 = vshrl.u32 %v160, 7
    %v162 = vsub.s32 0, %v161
    %v163 = vrot.slane %v158, %v162
    %165 = vmatprep.subr.mxu0 0.0
    %166 = vmatpush1.msra.mxu0 %v142
    %167 = vmatprep.subr.mxu0 0.0
    %168 = vmatpush1.msra.mxu0 %v143
    %169 = vmatprep.subr.mxu0 0.0
    %170 = vmatpush1.msra.mxu0 %v144
    %171 = vmatprep.subr.mxu0 0.0
    %172 = vmatpush1.msra.mxu0 %v145
    %173 = vmatprep.subr.mxu0 0.0
    %174 = vmatpush1.msra.mxu0 %v146
    %175 = vmatprep.subr.mxu0 0.0
    %176 = vmatpush1.msra.mxu0 %v147
    %177 = vmatprep.subr.mxu0 0.0
    %178 = vmatpush1.msra.mxu0 %v148
    %179 = vmatprep.subr.mxu0 0.0
    %180 = vmatpush1.msra.mxu0 %v149
    %181 = vmatprep.subr.mxu0 0.0
    %182 = vmatpush1.msra.mxu0 %v150
    %183 = vmatprep.subr.mxu0 0.0
    %184 = vmatpush1.msra.mxu0 %v151
    %185 = vmatprep.subr.mxu0 0.0
    %186 = vmatpush1.msra.mxu0 %v152
    %187 = vmatprep.subr.mxu0 0.0
    %188 = vmatpush1.msra.mxu0 %v153
    %189 = vmatprep.subr.mxu0 0.0
    %190 = vmatpush1.msra.mxu0 %v154
    %191 = vmatprep.subr.mxu0 0.0
    %192 = vmatpush1.msra.mxu0 %v155
    %193 = vmatprep.subr.mxu0 0.0
    %194 = vmatpush1.msra.mxu0 %v156
    %195 = vmatprep.subr.mxu0 0.0
    %196 = vmatpush1.msra.mxu0 %v157
    %197 = vmatprep.subr.mxu0 0.0
    %198 = vmatpush1.msra.mxu0 0.0
    %199 = vmatprep.subr.mxu0 0.0
    %200 = vmatpush1.msra.mxu0 0.0
    %201 = vmatprep.subr.mxu0 0.0
    %202 = vmatpush1.msra.mxu0 0.0
    %203 = vmatprep.subr.mxu0 0.0
    %204 = vmatpush1.msra.mxu0 0.0
    %205 = vmatprep.subr.mxu0 0.0
    %206 = vmatpush1.msra.mxu0 0.0
    %207 = vmatprep.subr.mxu0 0.0
    %208 = vmatpush1.msra.mxu0 0.0
    %209 = vmatprep.subr.mxu0 0.0
    %210 = vmatpush1.msra.mxu0 0.0
    %211 = vmatprep.subr.mxu0 0.0
    %212 = vmatpush1.msra.mxu0 0.0
    %213 = vmatprep.subr.mxu0 0.0
    %214 = vmatpush1.msra.mxu0 0.0
    %215 = vmatprep.subr.mxu0 0.0
    %216 = vmatpush1.msra.mxu0 0.0
    %217 = vmatprep.subr.mxu0 0.0
    %218 = vmatpush1.msra.mxu0 0.0
    %219 = vmatprep.subr.mxu0 0.0
    %220 = vmatpush1.msra.mxu0 0.0
    %221 = vmatprep.subr.mxu0 0.0
    %222 = vmatpush1.msra.mxu0 0.0
    %223 = vmatprep.subr.mxu0 0.0
    %224 = vmatpush1.msra.mxu0 0.0
    %225 = vmatprep.subr.mxu0 0.0
    %226 = vmatpush1.msra.mxu0 0.0
    %227 = vmatprep.subr.mxu0 0.0
    %228 = vmatpush1.msra.mxu0 0.0
    %229 = vmatprep.mubr.f32.mxu0 0.0
    %230 = vmatmul.mubr.f32.gmra.mrb[0].mxu0 %v141
    %v231 = vpop.f32.mrb[0].mxu0
    %v232 = vadd.f32 %v163, %v231
    %v233 = vpop.f32.mrb[0].mxu0
    %234 = vdwg.mxu0
    %v235 = vlaneseq
    %v236 = vand.u32 %v235, 127
    %vm237 = vcmp.lt.s32.totalorder %v236, 4
    %v238 = vsel %vm237, %v232, -1e+30
    %239 = vmax.xlane.f32.xlu0 %v238
    %v240 = vpop.xlane.xlu0 %239
    %v241 = vsub.f32 %v238, %v240
    %v242 = vmul.f32 %v241, 1.442695
    %v243 = vpow.pop %v242
    %244 = vadd.xlane.f32.xlu0 %v243
    %v245 = vpop.xlane.xlu0 %244
    %v246 = vrcp.pop %v245
    %v247 = vlog2.pop %v245
    %v248 = vmul.f32 %v247, 0.6931472
    %v249 = vmul.f32 %v243, %v246
    %v250 = vsub.f32 %v232, %v240
    %v251 = vsub.f32 %v250, %v248
    %vm252 = vcmp.lt.s32.totalorder %v236, 8
    %vm253 = vcmp.eq.s32.totalorder %v236, 8
    %v254 = vsel %vm253, %v232, 0.0
    %v255 = vsel %vm252, %v251, %v254
    %v256 = vsel %vm237, %v249, %v255
    %257 = vst [vmem:[#allocation8] sm:$0xff] %v256
    // Predicated region
    $region34: #{tpu_custom_call.1} parent=1 // pred_check
      _
    $region35: #{tpu_custom_call.1} parent=1 // pred_check_branch
      %259 = sbr.rel (0) target = $region37
    $region36: #{tpu_custom_call.1} parent=1 // pred_region
      %s261 = ssub.s32 128, 128
      %262 = vsyncadd [#allocation4], %s261
      %s264 = sshll.u32 [#allocation8], 4
      %s265 = int_to_ptr.vmem [resolvable:$true] %s264
      %267 = dma.vmem_to_hbm [thread:$0]  %s265, 128, %s5, [#allocation4]
    $region37: #{tpu_custom_call.1} parent=1 // pred_fallthru
      _
    // Predicated region
    $region38: #{tpu_custom_call.1} parent=1 // pred_check
      _
    $region39: #{tpu_custom_call.1} parent=1 // pred_check_branch
      %269 = sbr.rel (0) target = $region41
    $region40: #{tpu_custom_call.1} parent=1 // pred_region
      %270 = dma.done [#allocation4], 128
    $region41: #{tpu_custom_call.1} parent=1 // pred_fallthru
      _
    %271 = vsyncpa [#allocation3], 1
    %272 = vsyncpa [#allocation6], 1
    %273 = vsyncpa [#allocation4], 1

</llo_original>
